<compile_context>
chip_gen: v5e
topology: v5e:2x2
jax: 0.10.0
libtpu: 0.0.40
codegen_flags: <defaults>
</compile_context>

<pallas_src>
import jax
import jax.numpy as jnp
from jax.experimental import pallas as pl
from jax.experimental.pallas import tpu as pltpu


# ----------------------------- Pallas kernel --------------------------------
def _rope_kernel(q_ref, k_ref, cos_ref, sin_ref, qo_ref, ko_ref):
    # q/k refs are (HB, TS, D); cos/sin refs are (TS, D).  sin is sign-folded
    # ([-sin, sin]) so that rotate_half(x)*[sin,sin] == roll(x, D//2)*[-sin,sin].
    half = q_ref.shape[-1] // 2
    cos = cos_ref[...]
    sin = sin_ref[...]
    # Static unrolled loop over the heads folded into this block; every vector
    # op stays 2-D so rotate_half is one XLU lane roll per head (not VPU work).
    for h in range(q_ref.shape[0]):
        q = q_ref[h]
        k = k_ref[h]
        q_rot = pltpu.roll(q, half, axis=1)
        k_rot = pltpu.roll(k, half, axis=1)
        qo_ref[h] = (q * cos + q_rot * sin).astype(qo_ref.dtype)
        ko_ref[h] = (k * cos + k_rot * sin).astype(ko_ref.dtype)


def _pick_tiles(S, H, D, itemsize, vmem_budget_bytes=24 * 1024 * 1024):
    """Pick (head_tile, seq_tile) so double-buffered blocks fit the VMEM budget."""

    def block_bytes(hb, ts):
        # q/k in + out blocks (4*hb rows) + cos/sin blocks (2 rows), x2 buffers.
        return 2 * ts * D * itemsize * (4 * hb + 2)

    if block_bytes(1, S) <= vmem_budget_bytes:
        # Whole sequence fits per step: fold as many heads per step as allowed
        # (fewer grid steps; cos/sin loaded once per batch and reused).
        hb = H
        while hb > 1 and (block_bytes(hb, S) > vmem_budget_bytes or H % hb):
            hb -= 1
        return hb, S

    cap = max(8, vmem_budget_bytes // (2 * D * itemsize * 6))
    ts = (cap // 8) * 8                   # second-minor block dim: multiple of 8
    t = ts
    while t >= 8:                         # prefer a tile that divides S exactly
        if S % t == 0:
            return 1, t
        t -= 8
    return 1, ts                          # ragged edge; Pallas masks the partial block


# ------------------------------ Module wrapper -------------------------------
class LlamaRoPEPallas:
    def __init__(self, dim, max_position_embeddings=2048, base=10000,
                 dtype=jnp.float32, seq_block=None, head_block=None):
        self.dim = dim
        self.max_position_embeddings = max_position_embeddings
        self.base = base
        self.dtype = dtype
        self.seq_block = seq_block        # optional override of the auto tiles
        self.head_block = head_block
        inv_freq = 1.0 / (base ** (jnp.arange(0, dim, 2, dtype=jnp.float32) / dim))
        self.inv_freq = inv_freq
        self._set_cos_sin_cache(max_position_embeddings)

    def _set_cos_sin_cache(self, seq_len):
        self.max_seq_len_cached = seq_len
        t = jnp.arange(seq_len, dtype=jnp.float32)
        freqs = jnp.einsum('i,j->ij', t, self.inv_freq)        # [S, D/2]
        emb = jnp.concatenate([freqs, freqs], axis=-1)          # [S, D]
        self.cos_cached = jnp.cos(emb).astype(self.dtype)
        self.sin_cached = jnp.sin(emb).astype(self.dtype)
        # Sign-folded sin so the kernel's rotate_half is a single lane roll.
        s = jnp.sin(freqs)
        self._sin_signed_cached = jnp.concatenate([-s, s], axis=-1).astype(self.dtype)

    def __call__(self, q, k, seq_len, position_ids):
        # NOTE: this branch requires a concrete Python int seq_len (same as the
        # eager PyTorch module).
        if seq_len > self.max_seq_len_cached:
            self._set_cos_sin_cache(seq_len)

        B, H, S, D = q.shape
        itemsize = jnp.dtype(q.dtype).itemsize

        # Gather rows of the cos / sign-folded-sin caches by position id (glue).
        cos = jnp.take(self.cos_cached[:seq_len], position_ids, axis=0)        # [B,S,D]
        sin = jnp.take(self._sin_signed_cached[:seq_len], position_ids, axis=0)
        cos = cos.astype(q.dtype)
        sin = sin.astype(q.dtype)

        if self.seq_block is None and self.head_block is None:
            hb, ts = _pick_tiles(S, H, D, itemsize)
        else:
            ts = min(self.seq_block or S, S)
            if ts < S:
                ts = max(8, (ts // 8) * 8)  # (8,128) constraint on sub-full tiles
            hb = min(self.head_block or 1, H)
        while H % hb:                       # keep head blocks exact (no ragged heads)
            hb -= 1

        # Heads innermost: the cos/sin tile stays resident across head blocks.
        grid = (B, pl.cdiv(S, ts), H // hb)

        flops = 6 * B * H * S * D                              # 2 mul + 1 add, q and k
        bytes_accessed = (4 * B * H * S * D + 2 * B * S * D) * itemsize

        q_embed, k_embed = pl.pallas_call(
            _rope_kernel,
            out_shape=(jax.ShapeDtypeStruct(q.shape, q.dtype),
                       jax.ShapeDtypeStruct(k.shape, k.dtype)),
            grid_spec=pltpu.PrefetchScalarGridSpec(
                num_scalar_prefetch=0,
                grid=grid,
                in_specs=[
                    pl.BlockSpec((None, hb, ts, D), lambda b, s, h: (b, h, s, 0)),
                    pl.BlockSpec((None, hb, ts, D), lambda b, s, h: (b, h, s, 0)),
                    pl.BlockSpec((None, ts, D), lambda b, s, h: (b, s, 0)),
                    pl.BlockSpec((None, ts, D), lambda b, s, h: (b, s, 0)),
                ],
                out_specs=[
                    pl.BlockSpec((None, hb, ts, D), lambda b, s, h: (b, h, s, 0)),
                    pl.BlockSpec((None, hb, ts, D), lambda b, s, h: (b, h, s, 0)),
                ],
            ),
            input_output_aliases={0: 0, 1: 1},                 # update q/k in place
            cost_estimate=pl.CostEstimate(flops=flops, transcendentals=0,
                                          bytes_accessed=bytes_accessed),
            compiler_params=pltpu.CompilerParams(
                dimension_semantics=("parallel", "parallel", "parallel"),
                vmem_limit_bytes=32 * 1024 * 1024),
        )(q, k, cos, sin)
        return q_embed, k_embed


# ------------------------------ Reference (JAX) ------------------------------
def _rotate_half_ref(x):
    half = x.shape[-1] // 2
    return jnp.concatenate([-x[..., half:], x[..., :half]], axis=-1)


def _rope_ref(q, k, cos_cached, sin_cached, position_ids):
    cos = jnp.take(cos_cached, position_ids, axis=0)[:, None, :, :]
    sin = jnp.take(sin_cached, position_ids, axis=0)[:, None, :, :]
    q_embed = q * cos + _rotate_half_ref(q) * sin
    k_embed = k * cos + _rotate_half_ref(k) * sin
    return q_embed, k_embed


# ----------------------------------- Main ------------------------------------
if __name__ == "__main__":
    # head_dim=128 (the realistic LLaMA value) keeps output stores lane-dense.
    B, H, S, D = 2, 4, 16, 128
    MAX_POS = 64

    key = jax.random.PRNGKey(0)
    kq, kk, kp = jax.random.split(key, 3)
    q = jax.random.normal(kq, (B, H, S, D), dtype=jnp.float32)
    k = jax.random.normal(kk, (B, H, S, D), dtype=jnp.float32)
    position_ids = jax.random.randint(kp, (B, S), 0, MAX_POS, dtype=jnp.int32)

    rope_auto = LlamaRoPEPallas(dim=D, max_position_embeddings=MAX_POS, base=10000)

    # Pure-JAX reference, computed first (independent of in-place aliasing).
    q_ref_out, k_ref_out = _rope_ref(q, k, rope_auto.cos_cached,
                                     rope_auto.sin_cached, position_ids)
    q_ref_out, k_ref_out = jax.block_until_ready((q_ref_out, k_ref_out))

    # Path 1: auto tiling -> full-sequence seq tile, all 4 heads folded per step.
    q1, k1 = rope_auto(q, k, seq_len=MAX_POS, position_ids=position_ids)
    jax.block_until_ready((q1, k1))
    assert jnp.allclose(q1, q_ref_out, atol=1e-5, rtol=1e-5)
    assert jnp.allclose(k1, k_ref_out, atol=1e-5, rtol=1e-5)

    # Path 2: forced seq tiling (seq_block=8, one head per grid step).
    rope_tiled = LlamaRoPEPallas(dim=D, max_position_embeddings=MAX_POS,
                                 base=10000, seq_block=8)
    q2, k2 = rope_tiled(q, k, seq_len=MAX_POS, position_ids=position_ids)
    jax.block_until_ready((q2, k2))
    assert jnp.allclose(q2, q_ref_out, atol=1e-5, rtol=1e-5)
    assert jnp.allclose(k2, k_ref_out, atol=1e-5, rtol=1e-5)

    print("KERNEL_OK")
</pallas_src>

<mosaic_0001>
module attributes {stable_mosaic.version = 11 : i64} {
  func.func @_rope_kernel(%arg0: i32, %arg1: i32, %arg2: i32, %arg3: memref<1x4x16x128xf32, #tpu.memory_space<vmem>>, %arg4: memref<1x4x16x128xf32, #tpu.memory_space<vmem>>, %arg5: memref<1x16x128xf32, #tpu.memory_space<vmem>>, %arg6: memref<1x16x128xf32, #tpu.memory_space<vmem>>, %arg7: memref<1x4x16x128xf32, #tpu.memory_space<vmem>>, %arg8: memref<1x4x16x128xf32, #tpu.memory_space<vmem>>) attributes {dimension_semantics = [#tpu.dimension_semantics<parallel>, #tpu.dimension_semantics<parallel>, #tpu.dimension_semantics<parallel>], iteration_bounds = array<i64: 2, 1, 1>, scalar_prefetch = 0 : i64, scratch_operands = 0 : i64, tpu.core_type = #tpu.core_type<tc>, window_params = [{transform_indices = @transform_0, window_bounds = array<i64: 1, 4, 16, 128>}, {transform_indices = @transform_1, window_bounds = array<i64: 1, 4, 16, 128>}, {transform_indices = @transform_2, window_bounds = array<i64: 1, 16, 128>}, {transform_indices = @transform_3, window_bounds = array<i64: 1, 16, 128>}, {transform_indices = @transform_4, window_bounds = array<i64: 1, 4, 16, 128>}, {transform_indices = @transform_5, window_bounds = array<i64: 1, 4, 16, 128>}]} {
    %c0 = arith.constant 0 : index
    %c0_0 = arith.constant 0 : index
    %c0_1 = arith.constant 0 : index
    %0 = vector.load %arg5[%c0, %c0_0, %c0_1] : memref<1x16x128xf32, #tpu.memory_space<vmem>>, vector<1x16x128xf32>
    %1 = vector.shape_cast %0 : vector<1x16x128xf32> to vector<16x128xf32>
    %c0_2 = arith.constant 0 : index
    %c0_3 = arith.constant 0 : index
    %c0_4 = arith.constant 0 : index
    %2 = vector.load %arg6[%c0_2, %c0_3, %c0_4] : memref<1x16x128xf32, #tpu.memory_space<vmem>>, vector<1x16x128xf32>
    %3 = vector.shape_cast %2 : vector<1x16x128xf32> to vector<16x128xf32>
    %c0_5 = arith.constant 0 : index
    %c0_6 = arith.constant 0 : index
    %c0_7 = arith.constant 0 : index
    %c0_8 = arith.constant 0 : index
    %4 = vector.load %arg3[%c0_5, %c0_6, %c0_7, %c0_8] : memref<1x4x16x128xf32, #tpu.memory_space<vmem>>, vector<1x1x16x128xf32>
    %5 = vector.shape_cast %4 : vector<1x1x16x128xf32> to vector<16x128xf32>
    %c0_9 = arith.constant 0 : index
    %c0_10 = arith.constant 0 : index
    %c0_11 = arith.constant 0 : index
    %c0_12 = arith.constant 0 : index
    %6 = vector.load %arg4[%c0_9, %c0_10, %c0_11, %c0_12] : memref<1x4x16x128xf32, #tpu.memory_space<vmem>>, vector<1x1x16x128xf32>
    %7 = vector.shape_cast %6 : vector<1x1x16x128xf32> to vector<16x128xf32>
    %c64_i32 = arith.constant 64 : i32
    %8 = tpu.dynamic_rotate %5 by %c64_i32 dim 1 : vector<16x128xf32>, i32 -> vector<16x128xf32>
    %c64_i32_13 = arith.constant 64 : i32
    %9 = tpu.dynamic_rotate %7 by %c64_i32_13 dim 1 : vector<16x128xf32>, i32 -> vector<16x128xf32>
    %10 = arith.mulf %5, %1 : vector<16x128xf32>
    %11 = arith.mulf %8, %3 : vector<16x128xf32>
    %12 = arith.addf %10, %11 : vector<16x128xf32>
    %c0_14 = arith.constant 0 : index
    %c0_15 = arith.constant 0 : index
    %c0_16 = arith.constant 0 : index
    %c0_17 = arith.constant 0 : index
    %13 = vector.load %arg7[%c0_14, %c0_15, %c0_16, %c0_17] : memref<1x4x16x128xf32, #tpu.memory_space<vmem>>, vector<1x1x16x128xf32>
    %14 = vector.shape_cast %13 : vector<1x1x16x128xf32> to vector<16x128xf32>
    %15 = vector.shape_cast %12 : vector<16x128xf32> to vector<1x1x16x128xf32>
    tpu.vector_store %arg7[%c0_14, %c0_15, %c0_16, %c0_17], %15 {strides = array<i32>} : memref<1x4x16x128xf32, #tpu.memory_space<vmem>>, vector<1x1x16x128xf32>,
    %16 = arith.mulf %7, %1 : vector<16x128xf32>
    %17 = arith.mulf %9, %3 : vector<16x128xf32>
    %18 = arith.addf %16, %17 : vector<16x128xf32>
    %c0_18 = arith.constant 0 : index
    %c0_19 = arith.constant 0 : index
    %c0_20 = arith.constant 0 : index
    %c0_21 = arith.constant 0 : index
    %19 = vector.load %arg8[%c0_18, %c0_19, %c0_20, %c0_21] : memref<1x4x16x128xf32, #tpu.memory_space<vmem>>, vector<1x1x16x128xf32>
    %20 = vector.shape_cast %19 : vector<1x1x16x128xf32> to vector<16x128xf32>
    %21 = vector.shape_cast %18 : vector<16x128xf32> to vector<1x1x16x128xf32>
    tpu.vector_store %arg8[%c0_18, %c0_19, %c0_20, %c0_21], %21 {strides = array<i32>} : memref<1x4x16x128xf32, #tpu.memory_space<vmem>>, vector<1x1x16x128xf32>,
    %c0_22 = arith.constant 0 : index
    %c1 = arith.constant 1 : index
    %c0_23 = arith.constant 0 : index
    %c0_24 = arith.constant 0 : index
    %22 = vector.load %arg3[%c0_22, %c1, %c0_23, %c0_24] : memref<1x4x16x128xf32, #tpu.memory_space<vmem>>, vector<1x1x16x128xf32>
    %23 = vector.shape_cast %22 : vector<1x1x16x128xf32> to vector<16x128xf32>
    %c0_25 = arith.constant 0 : index
    %c1_26 = arith.constant 1 : index
    %c0_27 = arith.constant 0 : index
    %c0_28 = arith.constant 0 : index
    %24 = vector.load %arg4[%c0_25, %c1_26, %c0_27, %c0_28] : memref<1x4x16x128xf32, #tpu.memory_space<vmem>>, vector<1x1x16x128xf32>
    %25 = vector.shape_cast %24 : vector<1x1x16x128xf32> to vector<16x128xf32>
    %c64_i32_29 = arith.constant 64 : i32
    %26 = tpu.dynamic_rotate %23 by %c64_i32_29 dim 1 : vector<16x128xf32>, i32 -> vector<16x128xf32>
    %c64_i32_30 = arith.constant 64 : i32
    %27 = tpu.dynamic_rotate %25 by %c64_i32_30 dim 1 : vector<16x128xf32>, i32 -> vector<16x128xf32>
    %28 = arith.mulf %23, %1 : vector<16x128xf32>
    %29 = arith.mulf %26, %3 : vector<16x128xf32>
    %30 = arith.addf %28, %29 : vector<16x128xf32>
    %c0_31 = arith.constant 0 : index
    %c1_32 = arith.constant 1 : index
    %c0_33 = arith.constant 0 : index
    %c0_34 = arith.constant 0 : index
    %31 = vector.load %arg7[%c0_31, %c1_32, %c0_33, %c0_34] : memref<1x4x16x128xf32, #tpu.memory_space<vmem>>, vector<1x1x16x128xf32>
    %32 = vector.shape_cast %31 : vector<1x1x16x128xf32> to vector<16x128xf32>
    %33 = vector.shape_cast %30 : vector<16x128xf32> to vector<1x1x16x128xf32>
    tpu.vector_store %arg7[%c0_31, %c1_32, %c0_33, %c0_34], %33 {strides = array<i32>} : memref<1x4x16x128xf32, #tpu.memory_space<vmem>>, vector<1x1x16x128xf32>,
    %34 = arith.mulf %25, %1 : vector<16x128xf32>
    %35 = arith.mulf %27, %3 : vector<16x128xf32>
    %36 = arith.addf %34, %35 : vector<16x128xf32>
    %c0_35 = arith.constant 0 : index
    %c1_36 = arith.constant 1 : index
    %c0_37 = arith.constant 0 : index
    %c0_38 = arith.constant 0 : index
    %37 = vector.load %arg8[%c0_35, %c1_36, %c0_37, %c0_38] : memref<1x4x16x128xf32, #tpu.memory_space<vmem>>, vector<1x1x16x128xf32>
    %38 = vector.shape_cast %37 : vector<1x1x16x128xf32> to vector<16x128xf32>
    %39 = vector.shape_cast %36 : vector<16x128xf32> to vector<1x1x16x128xf32>
    tpu.vector_store %arg8[%c0_35, %c1_36, %c0_37, %c0_38], %39 {strides = array<i32>} : memref<1x4x16x128xf32, #tpu.memory_space<vmem>>, vector<1x1x16x128xf32>,
    %c0_39 = arith.constant 0 : index
    %c2 = arith.constant 2 : index
    %c0_40 = arith.constant 0 : index
    %c0_41 = arith.constant 0 : index
    %40 = vector.load %arg3[%c0_39, %c2, %c0_40, %c0_41] : memref<1x4x16x128xf32, #tpu.memory_space<vmem>>, vector<1x1x16x128xf32>
    %41 = vector.shape_cast %40 : vector<1x1x16x128xf32> to vector<16x128xf32>
    %c0_42 = arith.constant 0 : index
    %c2_43 = arith.constant 2 : index
    %c0_44 = arith.constant 0 : index
    %c0_45 = arith.constant 0 : index
    %42 = vector.load %arg4[%c0_42, %c2_43, %c0_44, %c0_45] : memref<1x4x16x128xf32, #tpu.memory_space<vmem>>, vector<1x1x16x128xf32>
    %43 = vector.shape_cast %42 : vector<1x1x16x128xf32> to vector<16x128xf32>
    %c64_i32_46 = arith.constant 64 : i32
    %44 = tpu.dynamic_rotate %41 by %c64_i32_46 dim 1 : vector<16x128xf32>, i32 -> vector<16x128xf32>
    %c64_i32_47 = arith.constant 64 : i32
    %45 = tpu.dynamic_rotate %43 by %c64_i32_47 dim 1 : vector<16x128xf32>, i32 -> vector<16x128xf32>
    %46 = arith.mulf %41, %1 : vector<16x128xf32>
    %47 = arith.mulf %44, %3 : vector<16x128xf32>
    %48 = arith.addf %46, %47 : vector<16x128xf32>
    %c0_48 = arith.constant 0 : index
    %c2_49 = arith.constant 2 : index
    %c0_50 = arith.constant 0 : index
    %c0_51 = arith.constant 0 : index
    %49 = vector.load %arg7[%c0_48, %c2_49, %c0_50, %c0_51] : memref<1x4x16x128xf32, #tpu.memory_space<vmem>>, vector<1x1x16x128xf32>
    %50 = vector.shape_cast %49 : vector<1x1x16x128xf32> to vector<16x128xf32>
    %51 = vector.shape_cast %48 : vector<16x128xf32> to vector<1x1x16x128xf32>
    tpu.vector_store %arg7[%c0_48, %c2_49, %c0_50, %c0_51], %51 {strides = array<i32>} : memref<1x4x16x128xf32, #tpu.memory_space<vmem>>, vector<1x1x16x128xf32>,
    %52 = arith.mulf %43, %1 : vector<16x128xf32>
    %53 = arith.mulf %45, %3 : vector<16x128xf32>
    %54 = arith.addf %52, %53 : vector<16x128xf32>
    %c0_52 = arith.constant 0 : index
    %c2_53 = arith.constant 2 : index
    %c0_54 = arith.constant 0 : index
    %c0_55 = arith.constant 0 : index
    %55 = vector.load %arg8[%c0_52, %c2_53, %c0_54, %c0_55] : memref<1x4x16x128xf32, #tpu.memory_space<vmem>>, vector<1x1x16x128xf32>
    %56 = vector.shape_cast %55 : vector<1x1x16x128xf32> to vector<16x128xf32>
    %57 = vector.shape_cast %54 : vector<16x128xf32> to vector<1x1x16x128xf32>
    tpu.vector_store %arg8[%c0_52, %c2_53, %c0_54, %c0_55], %57 {strides = array<i32>} : memref<1x4x16x128xf32, #tpu.memory_space<vmem>>, vector<1x1x16x128xf32>,
    %c0_56 = arith.constant 0 : index
    %c3 = arith.constant 3 : index
    %c0_57 = arith.constant 0 : index
    %c0_58 = arith.constant 0 : index
    %58 = vector.load %arg3[%c0_56, %c3, %c0_57, %c0_58] : memref<1x4x16x128xf32, #tpu.memory_space<vmem>>, vector<1x1x16x128xf32>
    %59 = vector.shape_cast %58 : vector<1x1x16x128xf32> to vector<16x128xf32>
    %c0_59 = arith.constant 0 : index
    %c3_60 = arith.constant 3 : index
    %c0_61 = arith.constant 0 : index
    %c0_62 = arith.constant 0 : index
    %60 = vector.load %arg4[%c0_59, %c3_60, %c0_61, %c0_62] : memref<1x4x16x128xf32, #tpu.memory_space<vmem>>, vector<1x1x16x128xf32>
    %61 = vector.shape_cast %60 : vector<1x1x16x128xf32> to vector<16x128xf32>
    %c64_i32_63 = arith.constant 64 : i32
    %62 = tpu.dynamic_rotate %59 by %c64_i32_63 dim 1 : vector<16x128xf32>, i32 -> vector<16x128xf32>
    %c64_i32_64 = arith.constant 64 : i32
    %63 = tpu.dynamic_rotate %61 by %c64_i32_64 dim 1 : vector<16x128xf32>, i32 -> vector<16x128xf32>
    %64 = arith.mulf %59, %1 : vector<16x128xf32>
    %65 = arith.mulf %62, %3 : vector<16x128xf32>
    %66 = arith.addf %64, %65 : vector<16x128xf32>
    %c0_65 = arith.constant 0 : index
    %c3_66 = arith.constant 3 : index
    %c0_67 = arith.constant 0 : index
    %c0_68 = arith.constant 0 : index
    %67 = vector.load %arg7[%c0_65, %c3_66, %c0_67, %c0_68] : memref<1x4x16x128xf32, #tpu.memory_space<vmem>>, vector<1x1x16x128xf32>
    %68 = vector.shape_cast %67 : vector<1x1x16x128xf32> to vector<16x128xf32>
    %69 = vector.shape_cast %66 : vector<16x128xf32> to vector<1x1x16x128xf32>
    tpu.vector_store %arg7[%c0_65, %c3_66, %c0_67, %c0_68], %69 {strides = array<i32>} : memref<1x4x16x128xf32, #tpu.memory_space<vmem>>, vector<1x1x16x128xf32>,
    %70 = arith.mulf %61, %1 : vector<16x128xf32>
    %71 = arith.mulf %63, %3 : vector<16x128xf32>
    %72 = arith.addf %70, %71 : vector<16x128xf32>
    %c0_69 = arith.constant 0 : index
    %c3_70 = arith.constant 3 : index
    %c0_71 = arith.constant 0 : index
    %c0_72 = arith.constant 0 : index
    %73 = vector.load %arg8[%c0_69, %c3_70, %c0_71, %c0_72] : memref<1x4x16x128xf32, #tpu.memory_space<vmem>>, vector<1x1x16x128xf32>
    %74 = vector.shape_cast %73 : vector<1x1x16x128xf32> to vector<16x128xf32>
    %75 = vector.shape_cast %72 : vector<16x128xf32> to vector<1x1x16x128xf32>
    tpu.vector_store %arg8[%c0_69, %c3_70, %c0_71, %c0_72], %75 {strides = array<i32>} : memref<1x4x16x128xf32, #tpu.memory_space<vmem>>, vector<1x1x16x128xf32>,
    return
  }
  func.func @transform_0(%arg0: i32, %arg1: i32, %arg2: i32) -> (i32, i32, i32, i32) {
    %c0_i32 = arith.constant 0 : i32
    %c0_i32_0 = arith.constant 0 : i32
    return %arg0, %arg2, %arg1, %c0_i32 : i32, i32, i32, i32
  }
  func.func @transform_1(%arg0: i32, %arg1: i32, %arg2: i32) -> (i32, i32, i32, i32) {
    %c0_i32 = arith.constant 0 : i32
    %c0_i32_0 = arith.constant 0 : i32
    return %arg0, %arg2, %arg1, %c0_i32 : i32, i32, i32, i32
  }
  func.func @transform_2(%arg0: i32, %arg1: i32, %arg2: i32) -> (i32, i32, i32) {
    %c0_i32 = arith.constant 0 : i32
    %c0_i32_0 = arith.constant 0 : i32
    return %arg0, %arg1, %c0_i32 : i32, i32, i32
  }
  func.func @transform_3(%arg0: i32, %arg1: i32, %arg2: i32) -> (i32, i32, i32) {
    %c0_i32 = arith.constant 0 : i32
    %c0_i32_0 = arith.constant 0 : i32
    return %arg0, %arg1, %c0_i32 : i32, i32, i32
  }
  func.func @transform_4(%arg0: i32, %arg1: i32, %arg2: i32) -> (i32, i32, i32, i32) {
    %c0_i32 = arith.constant 0 : i32
    %c0_i32_0 = arith.constant 0 : i32
    return %arg0, %arg2, %arg1, %c0_i32 : i32, i32, i32, i32
  }
  func.func @transform_5(%arg0: i32, %arg1: i32, %arg2: i32) -> (i32, i32, i32, i32) {
    %c0_i32 = arith.constant 0 : i32
    %c0_i32_0 = arith.constant 0 : i32
    return %arg0, %arg2, %arg1, %c0_i32 : i32, i32, i32, i32
  }
}

</mosaic_0001>

<llo_original>
// kernel: tpu_custom_call.1
$region0: #{tpu_custom_call.1}
  #allocation0 [shape = 'u32[]', space=smem, size = 0x4, offset = 0x4, fixed_abs, tag = 'smem constant byte address 0x4 - core index']
  #allocation1 [shape = 'u32[72,128]{1,0:T(1,128)}', space=vmem, size = 0x9000, scoped, tag = 'internal scratch']
  %s0 = inlined_call_operand.hbm [shape: f32[2,4,16,128], index: 0, kind: input, shape index: {}, may-alias: {0,4}]
  %s1 = inlined_call_operand.hbm [shape: f32[2,4,16,128], index: 1, kind: input, shape index: {}, may-alias: {1,5}]
  %s2 = inlined_call_operand.vmem [shape: f32[2,16,128], index: 2, kind: input, shape index: {}]
  %s3 = inlined_call_operand.vmem [shape: f32[2,16,128], index: 3, kind: input, shape index: {}]
  %s4 = inlined_call_operand.hbm [shape: f32[2,4,16,128], index: 4, kind: output, shape index: {0}, may-alias: {0,4}]
  %s5 = inlined_call_operand.hbm [shape: f32[2,4,16,128], index: 5, kind: output, shape index: {1}, may-alias: {1,5}]
  %6 = xla_tuple %s4, %s5
  %s7 = sld [smem:[#allocation0]]
  $region65: #{tpu_custom_call.1} parent=0
    _
  %s9 = ssub.s32 1, %s7
  %s10 = scalar_select 0, %s9, %s7
  $region1: #{tpu_custom_call.1} parent=0
    #allocation2 [shape = 'u8[65536]{0}', space=vmem, size = 0x10000, scoped, tag = 'input window, operand 0']
    #allocation3 [shape = 's32[2]{0}', space=sflag, size = 0x8, scoped, tag = 'scoped memory for tpu_custom_call.1']
    #allocation4 [shape = 's32[2]{0}', space=sflag, size = 0x8, scoped, tag = 'scoped memory for tpu_custom_call.1']
    #allocation5 [shape = 'u8[65536]{0}', space=vmem, size = 0x10000, scoped, tag = 'input window, operand 1']
    #allocation6 [shape = 's32[2]{0}', space=sflag, size = 0x8, scoped, tag = 'scoped memory for tpu_custom_call.1']
    #allocation7 [shape = 'u8[65536]{0}', space=vmem, size = 0x10000, scoped, tag = 'output window, operand 0']
    #allocation8 [shape = 'u8[65536]{0}', space=vmem, size = 0x10000, scoped, tag = 'output window, operand 1']
    #allocation9 [shape = 's32[2]{0}', space=sflag, size = 0x8, scoped, tag = 'scoped memory for tpu_custom_call.1']
    %11 = vsyncpa [#allocation3], 0
    %s12 = scalar_lea.sflag [#allocation3], 1
    %13 = vsyncpa %s12, 0
    %14 = vsyncpa [#allocation6], 0
    %s15 = scalar_lea.sflag [#allocation6], 1
    %16 = vsyncpa %s15, 0
    %17 = vsyncpa [#allocation4], 0
    %s18 = scalar_lea.sflag [#allocation4], 1
    %19 = vsyncpa %s18, 0
    %20 = vsyncpa [#allocation9], 0
    %s21 = scalar_lea.sflag [#allocation9], 1
    %22 = vsyncpa %s21, 0
    loop: start=0, step=1, limit=4
    $region2: #{tpu_custom_call.1} parent=1 // loop_pre_header
      _
    $region3: #{tpu_custom_call.1} parent=1 // loop_header
      %s24 = sphi 0, %s28
      %p25 = scmp.ge.s32.totalorder %s24, 4
      %s31 = sphi 0, %s50
      %s32 = sphi 0, %s46
      %s33 = sphi 0, %s42
      %s34 = sphi 0, %s31
      %s35 = sphi 0, %s32
      %s36 = sphi 0, %s33
      %s37 = sphi 0, %s34
      %s38 = sphi 0, %s35
      %s39 = sphi 0, %s36
      %s57 = sphi 0, %s59
      %s60 = sphi 0, %s57
      %s61 = sphi 0, %s60
      %s77 = sphi 0, %s61
      %s87 = sphi 0, %s89
      %s90 = sphi 0, %s87
      %s91 = sphi 0, %s90
      %s107 = sphi 0, %s91
      %s115 = sphi 0, %s117
      %s118 = sphi 0, %s115
      %s119 = sphi 0, %s118
      %s135 = sphi 0, %s119
      %s143 = sphi 0, %s145
      %s146 = sphi 0, %s143
      %s147 = sphi 0, %s146
      %s163 = sphi 0, %s147
      %s173 = sphi 0, %s175
      %s176 = sphi 0, %s173
      %s177 = sphi 0, %s176
      %s193 = sphi 0, %s177
      %s203 = sphi 0, %s205
      %s206 = sphi 0, %s203
      %s207 = sphi 0, %s206
      %s223 = sphi 0, %s207
    $region4: #{tpu_custom_call.1} parent=1 // loop_header_branch
      %27 = sbr.rel (%p25) target = $region8
    $region5: #{tpu_custom_call.1} parent=1 // loop_body
      %s29 = ssub.s32 %s24, 1
      %s30 = ssub.s32 %s24, 2
      %s40 = sadd.s32 1, %s33
      %p41 = scmp.ge.s32.totalorder %s40, 1
      %s42 = scalar_select %p41, 0, %s40
      %s43 = sadd.s32 1, %s32
      %s44 = scalar_select %p41, %s43, %s32
      %p45 = scmp.ge.s32.totalorder %s44, 1
      %s46 = scalar_select %p45, 0, %s44
      %s47 = sadd.s32 1, %s31
      %s48 = scalar_select %p45, %s47, %s31
      %p49 = scmp.ge.s32.totalorder %s48, 2
      %s50 = scalar_select %p49, 0, %s48
      %s51 = ssub.s32 %s31, %s50
      %s52 = ssub.s32 %s33, %s42
      %s53 = sor.u32 %s51, %s52
      %s54 = ssub.s32 %s32, %s46
      %s55 = sor.u32 %s53, %s54
      %p56 = scmp.eq.s32.totalorder %s55, 0
      %s58 = sadd.s32 %s57, 1
      %s59 = scalar_select %p56, %s57, %s58
      %p62 = pneg %p56
      %p63 = scmp.eq.s32.totalorder %s24, 1
      %p64 = por %p62, %p63
      %p65 = scmp.ne.s32.totalorder %s57, %s60
      %p66 = scmp.eq.s32.totalorder %s24, 0
      %p67 = por %p65, %p66
      %p68 = scmp.ne.s32.totalorder %s57, %s60
      %p69 = scmp.eq.s32.totalorder %s29, 1
      %p70 = por %p68, %p69
      %p71 = scmp.ne.s32.totalorder %s60, %s61
      %p72 = scmp.eq.s32.totalorder %s29, 0
      %p73 = por %p71, %p72
      %p74 = scmp.ne.s32.totalorder %s60, %s61
      %p75 = scmp.eq.s32.totalorder %s30, 1
      %p76 = por %p74, %p75
      %p78 = scmp.ne.s32.totalorder %s61, %s77
      %p79 = scmp.eq.s32.totalorder %s30, 0
      %p80 = por %p78, %p79
      %s81 = ssub.s32 %s31, %s50
      %s82 = ssub.s32 %s33, %s42
      %s83 = sor.u32 %s81, %s82
      %s84 = ssub.s32 %s32, %s46
      %s85 = sor.u32 %s83, %s84
      %p86 = scmp.eq.s32.totalorder %s85, 0
      %s88 = sadd.s32 %s87, 1
      %s89 = scalar_select %p86, %s87, %s88
      %p92 = pneg %p86
      %p93 = scmp.eq.s32.totalorder %s24, 1
      %p94 = por %p92, %p93
      %p95 = scmp.ne.s32.totalorder %s87, %s90
      %p96 = scmp.eq.s32.totalorder %s24, 0
      %p97 = por %p95, %p96
      %p98 = scmp.ne.s32.totalorder %s87, %s90
      %p99 = scmp.eq.s32.totalorder %s29, 1
      %p100 = por %p98, %p99
      %p101 = scmp.ne.s32.totalorder %s90, %s91
      %p102 = scmp.eq.s32.totalorder %s29, 0
      %p103 = por %p101, %p102
      %p104 = scmp.ne.s32.totalorder %s90, %s91
      %p105 = scmp.eq.s32.totalorder %s30, 1
      %p106 = por %p104, %p105
      %p108 = scmp.ne.s32.totalorder %s91, %s107
      %p109 = scmp.eq.s32.totalorder %s30, 0
      %p110 = por %p108, %p109
      %s111 = ssub.s32 %s31, %s50
      %s112 = ssub.s32 %s32, %s46
      %s113 = sor.u32 %s111, %s112
      %p114 = scmp.eq.s32.totalorder %s113, 0
      %s116 = sadd.s32 %s115, 1
      %s117 = scalar_select %p114, %s115, %s116
      %p120 = pneg %p114
      %p121 = scmp.eq.s32.totalorder %s24, 1
      %p122 = por %p120, %p121
      %p123 = scmp.ne.s32.totalorder %s115, %s118
      %p124 = scmp.eq.s32.totalorder %s24, 0
      %p125 = por %p123, %p124
      %p126 = scmp.ne.s32.totalorder %s115, %s118
      %p127 = scmp.eq.s32.totalorder %s29, 1
      %p128 = por %p126, %p127
      %p129 = scmp.ne.s32.totalorder %s118, %s119
      %p130 = scmp.eq.s32.totalorder %s29, 0
      %p131 = por %p129, %p130
      %p132 = scmp.ne.s32.totalorder %s118, %s119
      %p133 = scmp.eq.s32.totalorder %s30, 1
      %p134 = por %p132, %p133
      %p136 = scmp.ne.s32.totalorder %s119, %s135
      %p137 = scmp.eq.s32.totalorder %s30, 0
      %p138 = por %p136, %p137
      %s139 = ssub.s32 %s31, %s50
      %s140 = ssub.s32 %s32, %s46
      %s141 = sor.u32 %s139, %s140
      %p142 = scmp.eq.s32.totalorder %s141, 0
      %s144 = sadd.s32 %s143, 1
      %s145 = scalar_select %p142, %s143, %s144
      %p148 = pneg %p142
      %p149 = scmp.eq.s32.totalorder %s24, 1
      %p150 = por %p148, %p149
      %p151 = scmp.ne.s32.totalorder %s143, %s146
      %p152 = scmp.eq.s32.totalorder %s24, 0
      %p153 = por %p151, %p152
      %p154 = scmp.ne.s32.totalorder %s143, %s146
      %p155 = scmp.eq.s32.totalorder %s29, 1
      %p156 = por %p154, %p155
      %p157 = scmp.ne.s32.totalorder %s146, %s147
      %p158 = scmp.eq.s32.totalorder %s29, 0
      %p159 = por %p157, %p158
      %p160 = scmp.ne.s32.totalorder %s146, %s147
      %p161 = scmp.eq.s32.totalorder %s30, 1
      %p162 = por %p160, %p161
      %p164 = scmp.ne.s32.totalorder %s147, %s163
      %p165 = scmp.eq.s32.totalorder %s30, 0
      %p166 = por %p164, %p165
      %s167 = ssub.s32 %s31, %s50
      %s168 = ssub.s32 %s33, %s42
      %s169 = sor.u32 %s167, %s168
      %s170 = ssub.s32 %s32, %s46
      %s171 = sor.u32 %s169, %s170
      %p172 = scmp.eq.s32.totalorder %s171, 0
      %s174 = sadd.s32 %s173, 1
      %s175 = scalar_select %p172, %s173, %s174
      %p178 = pneg %p172
      %p179 = scmp.eq.s32.totalorder %s24, 1
      %p180 = por %p178, %p179
      %p181 = scmp.ne.s32.totalorder %s173, %s176
      %p182 = scmp.eq.s32.totalorder %s24, 0
      %p183 = por %p181, %p182
      %p184 = scmp.ne.s32.totalorder %s173, %s176
      %p185 = scmp.eq.s32.totalorder %s29, 1
      %p186 = por %p184, %p185
      %p187 = scmp.ne.s32.totalorder %s176, %s177
      %p188 = scmp.eq.s32.totalorder %s29, 0
      %p189 = por %p187, %p188
      %p190 = scmp.ne.s32.totalorder %s176, %s177
      %p191 = scmp.eq.s32.totalorder %s30, 1
      %p192 = por %p190, %p191
      %p194 = scmp.ne.s32.totalorder %s177, %s193
      %p195 = scmp.eq.s32.totalorder %s30, 0
      %p196 = por %p194, %p195
      %s197 = ssub.s32 %s31, %s50
      %s198 = ssub.s32 %s33, %s42
      %s199 = sor.u32 %s197, %s198
      %s200 = ssub.s32 %s32, %s46
      %s201 = sor.u32 %s199, %s200
      %p202 = scmp.eq.s32.totalorder %s201, 0
      %s204 = sadd.s32 %s203, 1
      %s205 = scalar_select %p202, %s203, %s204
      %p208 = pneg %p202
      %p209 = scmp.eq.s32.totalorder %s24, 1
      %p210 = por %p208, %p209
      %p211 = scmp.ne.s32.totalorder %s203, %s206
      %p212 = scmp.eq.s32.totalorder %s24, 0
      %p213 = por %p211, %p212
      %p214 = scmp.ne.s32.totalorder %s203, %s206
      %p215 = scmp.eq.s32.totalorder %s29, 1
      %p216 = por %p214, %p215
      %p217 = scmp.ne.s32.totalorder %s206, %s207
      %p218 = scmp.eq.s32.totalorder %s29, 0
      %p219 = por %p217, %p218
      %p220 = scmp.ne.s32.totalorder %s206, %s207
      %p221 = scmp.eq.s32.totalorder %s30, 1
      %p222 = por %p220, %p221
      %p224 = scmp.ne.s32.totalorder %s207, %s223
      %p225 = scmp.eq.s32.totalorder %s30, 0
      %p226 = por %p224, %p225
      %p227 = scmp.le.s32.totalorder 1, %s24
      %p228 = scmp.lt.s32.totalorder %s24, 3
      %p229 = pnand %p227, %p228
      %p230 = pneg %p229
      // Predicated region
      $region9: #{tpu_custom_call.1} parent=5 // pred_check
        _
      $region10: #{tpu_custom_call.1} parent=5 // pred_check_branch
        %232 = sbr.rel (%p229) target = $region12
      $region11: #{tpu_custom_call.1} parent=5 // pred_region
        %s233 = ssub.s32 %s24, 1
      $region12: #{tpu_custom_call.1} parent=5 // pred_fallthru
        _
      %p234 = scmp.lt.s32.totalorder %s24, 2
      // Predicated region
      $region13: #{tpu_custom_call.1} parent=5 // pred_check
        %p235 = pneg %p234
      $region14: #{tpu_custom_call.1} parent=5 // pred_check_branch
        %237 = sbr.rel (%p235) target = $region16
      $region15: #{tpu_custom_call.1} parent=5 // pred_region
        // Predicated region
        $region17: #{tpu_custom_call.1} parent=15 // pred_check
          %p238 = pneg %p67
        $region18: #{tpu_custom_call.1} parent=15 // pred_check_branch
          %240 = sbr.rel (%p238) target = $region20
        $region19: #{tpu_custom_call.1} parent=15 // pred_region
          %s241 = sand.u32 %s57, 1
          %s242 = scalar_lea.sflag [#allocation3], %s241
          %s243 = sand.u32 %s57, 1
          %s244 = smul.addr %s243, 64
          %s245 = scalar_lea.vmem [#allocation2], %s244
          %s246 = smul.u32 4, %s33
          %s247 = smul.u32 2, %s32
          %249 = vsyncadd %s242, 0
          %s250 = smul.addr %s246, 2
          %s251 = sadd.s32 %s247, %s250
          %s252 = smul.addr %s31, 8
          %s253 = sadd.s32 %s251, %s252
          %s254 = smul.addr %s253, 8
          %s255 = scalar_lea.hbm %s0, %s254
          %s256 = sshll.u32 %s255, 4
          %s257 = int_to_ptr.hbm [resolvable:$true] %s256
          %s258 = sshll.u32 %s245, 4
          %s259 = int_to_ptr.vmem [resolvable:$true] %s258
          %264 = dma.hbm_to_vmem [thread:$0]  %s257, 1024, %s259, %s242, 128, 128, 8
        $region20: #{tpu_custom_call.1} parent=15 // pred_fallthru
          _
        // Predicated region
        $region21: #{tpu_custom_call.1} parent=15 // pred_check
          %p265 = pneg %p97
        $region22: #{tpu_custom_call.1} parent=15 // pred_check_branch
          %267 = sbr.rel (%p265) target = $region24
        $region23: #{tpu_custom_call.1} parent=15 // pred_region
          %s268 = sand.u32 %s87, 1
          %s269 = scalar_lea.sflag [#allocation6], %s268
          %s270 = sand.u32 %s87, 1
          %s271 = smul.addr %s270, 64
          %s272 = scalar_lea.vmem [#allocation5], %s271
          %s273 = smul.u32 4, %s33
          %s274 = smul.u32 2, %s32
          %276 = vsyncadd %s269, 0
          %s277 = smul.addr %s273, 2
          %s278 = sadd.s32 %s274, %s277
          %s279 = smul.addr %s31, 8
          %s280 = sadd.s32 %s278, %s279
          %s281 = smul.addr %s280, 8
          %s282 = scalar_lea.hbm %s1, %s281
          %s283 = sshll.u32 %s282, 4
          %s284 = int_to_ptr.hbm [resolvable:$true] %s283
          %s285 = sshll.u32 %s272, 4
          %s286 = int_to_ptr.vmem [resolvable:$true] %s285
          %291 = dma.hbm_to_vmem [thread:$0]  %s284, 1024, %s286, %s269, 128, 128, 8
        $region24: #{tpu_custom_call.1} parent=15 // pred_fallthru
          _
        // Predicated region
        $region25: #{tpu_custom_call.1} parent=15 // pred_check
          %p292 = pneg %p125
        $region26: #{tpu_custom_call.1} parent=15 // pred_check_branch
          %294 = sbr.rel (%p292) target = $region28
        $region27: #{tpu_custom_call.1} parent=15 // pred_region
          %s295 = smul.u32 2, %s32
          %p296 = scmp.lt.s32.totalorder %s31, 1
          %s297 = scalar_select %p296, %s31, 1
          %p298 = scmp.lt.s32.totalorder %s295, 1
          %s299 = scalar_select %p298, %s295, 1
          %s300 = smul.addr %s297, 2
          %s301 = sadd.s32 %s299, %s300
          %s302 = smul.addr %s301, 8
          %s303 = scalar_lea.vmem %s2, %s302
          %s304 = smul.u32 2, %s32
        $region28: #{tpu_custom_call.1} parent=15 // pred_fallthru
          _
        // Predicated region
        $region29: #{tpu_custom_call.1} parent=15 // pred_check
          %p305 = pneg %p153
        $region30: #{tpu_custom_call.1} parent=15 // pred_check_branch
          %307 = sbr.rel (%p305) target = $region32
        $region31: #{tpu_custom_call.1} parent=15 // pred_region
          %s308 = smul.u32 2, %s32
          %p309 = scmp.lt.s32.totalorder %s31, 1
          %s310 = scalar_select %p309, %s31, 1
          %p311 = scmp.lt.s32.totalorder %s308, 1
          %s312 = scalar_select %p311, %s308, 1
          %s313 = smul.addr %s310, 2
          %s314 = sadd.s32 %s312, %s313
          %s315 = smul.addr %s314, 8
          %s316 = scalar_lea.vmem %s3, %s315
          %s317 = smul.u32 2, %s32
        $region32: #{tpu_custom_call.1} parent=15 // pred_fallthru
          _
      $region16: #{tpu_custom_call.1} parent=5 // pred_fallthru
        _
      %p318 = scmp.le.s32.totalorder 1, %s24
      %p319 = scmp.lt.s32.totalorder %s24, 3
      %p320 = pnand %p318, %p319
      %p321 = pneg %p320
      // Predicated region
      $region33: #{tpu_custom_call.1} parent=5 // pred_check
        _
      $region34: #{tpu_custom_call.1} parent=5 // pred_check_branch
        %323 = sbr.rel (%p320) target = $region36
      $region35: #{tpu_custom_call.1} parent=5 // pred_region
        %s324 = ssub.s32 %s24, 1
        %s325 = sand.u32 %s60, 1
        %s326 = scalar_lea.sflag [#allocation3], %s325
        %s327 = sand.u32 %s60, 1
        %s328 = smul.addr %s327, 64
        %s329 = scalar_lea.vmem [#allocation2], %s328
        // Predicated region
        $region37: #{tpu_custom_call.1} parent=35 // pred_check
          %p330 = pneg %p73
        $region38: #{tpu_custom_call.1} parent=35 // pred_check_branch
          %332 = sbr.rel (%p330) target = $region40
        $region39: #{tpu_custom_call.1} parent=35 // pred_region
          %334 = dma.done %s326, 1024
        $region40: #{tpu_custom_call.1} parent=35 // pred_fallthru
          _
        %s335 = sand.u32 %s90, 1
        %s336 = scalar_lea.sflag [#allocation6], %s335
        %s337 = sand.u32 %s90, 1
        %s338 = smul.addr %s337, 64
        %s339 = scalar_lea.vmem [#allocation5], %s338
        // Predicated region
        $region41: #{tpu_custom_call.1} parent=35 // pred_check
          %p340 = pneg %p103
        $region42: #{tpu_custom_call.1} parent=35 // pred_check_branch
          %342 = sbr.rel (%p340) target = $region44
        $region43: #{tpu_custom_call.1} parent=35 // pred_region
          %344 = dma.done %s336, 1024
        $region44: #{tpu_custom_call.1} parent=35 // pred_fallthru
          _
        %s345 = sand.u32 %s60, 1
        %s346 = scalar_lea.sflag [#allocation3], %s345
        %s347 = sand.u32 %s60, 1
        %s348 = smul.addr %s347, 64
        %s349 = scalar_lea.vmem [#allocation2], %s348
        %p350 = pneg %p73
        %p351 = pneg %p70
        %s352 = sand.u32 %s90, 1
        %s353 = scalar_lea.sflag [#allocation6], %s352
        %s354 = sand.u32 %s90, 1
        %s355 = smul.addr %s354, 64
        %s356 = scalar_lea.vmem [#allocation5], %s355
        %p357 = pneg %p103
        %p358 = pneg %p100
        %s359 = smul.u32 2, %s35
        %p360 = scmp.lt.s32.totalorder %s34, 1
        %s361 = scalar_select %p360, %s34, 1
        %p362 = scmp.lt.s32.totalorder %s359, 1
        %s363 = scalar_select %p362, %s359, 1
        %s364 = smul.addr %s361, 2
        %s365 = sadd.s32 %s363, %s364
        %s366 = smul.addr %s365, 8
        %s367 = scalar_lea.vmem %s2, %s366
        %p368 = pneg %p131
        %p369 = pneg %p128
        %s370 = smul.u32 2, %s35
        %p371 = scmp.lt.s32.totalorder %s34, 1
        %s372 = scalar_select %p371, %s34, 1
        %p373 = scmp.lt.s32.totalorder %s370, 1
        %s374 = scalar_select %p373, %s370, 1
        %s375 = smul.addr %s372, 2
        %s376 = sadd.s32 %s374, %s375
        %s377 = smul.addr %s376, 8
        %s378 = scalar_lea.vmem %s3, %s377
        %p379 = pneg %p159
        %p380 = pneg %p156
        %p381 = pneg %p189
        %p382 = pneg %p186
        %s383 = sand.u32 %s176, 1
        %s384 = scalar_lea.sflag [#allocation4], %s383
        %s385 = sand.u32 %s176, 1
        %s386 = smul.addr %s385, 64
        %s387 = scalar_lea.vmem [#allocation7], %s386
        %p388 = pneg %p219
        %p389 = pneg %p216
        %s390 = sand.u32 %s206, 1
        %s391 = scalar_lea.sflag [#allocation9], %s390
        %s392 = sand.u32 %s206, 1
        %s393 = smul.addr %s392, 64
        %s394 = scalar_lea.vmem [#allocation8], %s393
        %s395 = smul.u32 4, %s36
        %s396 = smul.u32 2, %s35
        %s397 = smul.u32 4, %s36
        %s398 = smul.u32 2, %s35
        %s399 = smul.u32 2, %s35
        %p400 = scmp.lt.s32.totalorder %s34, 1
        %s401 = scalar_select %p400, %s34, 1
        %p402 = scmp.lt.s32.totalorder %s399, 1
        %s403 = scalar_select %p402, %s399, 1
        %s404 = smul.addr %s401, 2
        %s405 = sadd.s32 %s403, %s404
        %s406 = smul.addr %s405, 8
        %s407 = scalar_lea.vmem %s2, %s406
        %s408 = smul.u32 2, %s35
        %s409 = smul.u32 2, %s35
        %p410 = scmp.lt.s32.totalorder %s34, 1
        %s411 = scalar_select %p410, %s34, 1
        %p412 = scmp.lt.s32.totalorder %s409, 1
        %s413 = scalar_select %p412, %s409, 1
        %s414 = smul.addr %s411, 2
        %s415 = sadd.s32 %s413, %s414
        %s416 = smul.addr %s415, 8
        %s417 = scalar_lea.vmem %s3, %s416
        %s418 = smul.u32 2, %s35
        %s419 = smul.u32 4, %s36
        %s420 = smul.u32 2, %s35
        %s421 = smul.u32 4, %s36
        %s422 = smul.u32 2, %s35
        %v423 = vld [vmem:[%s407] sm:$0xff]
        %v424 = vld [vmem:[%s407 + $0x8] sm:$0xff]
        %v425 = vld [vmem:[%s417] sm:$0xff]
        %v426 = vld [vmem:[%s417 + $0x8] sm:$0xff]
        %v427 = vld [vmem:[%s329] sm:$0xff]
        %v428 = vld [vmem:[%s329 + $0x8] sm:$0xff]
        %v429 = vld [vmem:[%s339] sm:$0xff]
        %v430 = vld [vmem:[%s339 + $0x8] sm:$0xff]
        %431 = vrot.lane.b32.xlu0 %v427, 64
        %v432 = vpop.permute.xlu0 %431
        %433 = vrot.lane.b32.xlu0 %v428, 64
        %v434 = vpop.permute.xlu0 %433
        %435 = vrot.lane.b32.xlu0 %v429, 64
        %v436 = vpop.permute.xlu0 %435
        %437 = vrot.lane.b32.xlu0 %v430, 64
        %v438 = vpop.permute.xlu0 %437
        %v439 = vmul.f32 %v427, %v423
        %v440 = vmul.f32 %v428, %v424
        %v441 = vmul.f32 %v432, %v425
        %v442 = vmul.f32 %v434, %v426
        %v443 = vadd.f32 %v439, %v441
        %v444 = vadd.f32 %v440, %v442
        %445 = vst [vmem:[%s387] sm:$0xff] %v443
        %446 = vst [vmem:[%s387 + $0x8] sm:$0xff] %v444
        %v447 = vmul.f32 %v429, %v423
        %v448 = vmul.f32 %v430, %v424
        %v449 = vmul.f32 %v436, %v425
        %v450 = vmul.f32 %v438, %v426
        %v451 = vadd.f32 %v447, %v449
        %v452 = vadd.f32 %v448, %v450
        %453 = vst [vmem:[%s394] sm:$0xff] %v451
        %454 = vst [vmem:[%s394 + $0x8] sm:$0xff] %v452
        %s455 = scalar_lea.vmem %s329, 16 [#allocation2]
        %v456 = vld [vmem:[%s455] sm:$0xff]
        %v457 = vld [vmem:[%s455 + $0x8] sm:$0xff]
        %s458 = scalar_lea.vmem %s339, 16 [#allocation5]
        %v459 = vld [vmem:[%s458] sm:$0xff]
        %v460 = vld [vmem:[%s458 + $0x8] sm:$0xff]
        %461 = vrot.lane.b32.xlu0 %v456, 64
        %v462 = vpop.permute.xlu0 %461
        %463 = vrot.lane.b32.xlu0 %v457, 64
        %v464 = vpop.permute.xlu0 %463
        %465 = vrot.lane.b32.xlu0 %v459, 64
        %v466 = vpop.permute.xlu0 %465
        %467 = vrot.lane.b32.xlu0 %v460, 64
        %v468 = vpop.permute.xlu0 %467
        %v469 = vmul.f32 %v456, %v423
        %v470 = vmul.f32 %v457, %v424
        %v471 = vmul.f32 %v462, %v425
        %v472 = vmul.f32 %v464, %v426
        %v473 = vadd.f32 %v469, %v471
        %v474 = vadd.f32 %v470, %v472
        %s475 = scalar_lea.vmem %s387, 16 [#allocation7]
        %476 = vst [vmem:[%s475] sm:$0xff] %v473
        %477 = vst [vmem:[%s475 + $0x8] sm:$0xff] %v474
        %v478 = vmul.f32 %v459, %v423
        %v479 = vmul.f32 %v460, %v424
        %v480 = vmul.f32 %v466, %v425
        %v481 = vmul.f32 %v468, %v426
        %v482 = vadd.f32 %v478, %v480
        %v483 = vadd.f32 %v479, %v481
        %s484 = scalar_lea.vmem %s394, 16 [#allocation8]
        %485 = vst [vmem:[%s484] sm:$0xff] %v482
        %486 = vst [vmem:[%s484 + $0x8] sm:$0xff] %v483
        %s487 = scalar_lea.vmem %s329, 32 [#allocation2]
        %v488 = vld [vmem:[%s487] sm:$0xff]
        %v489 = vld [vmem:[%s487 + $0x8] sm:$0xff]
        %s490 = scalar_lea.vmem %s339, 32 [#allocation5]
        %v491 = vld [vmem:[%s490] sm:$0xff]
        %v492 = vld [vmem:[%s490 + $0x8] sm:$0xff]
        %493 = vrot.lane.b32.xlu0 %v488, 64
        %v494 = vpop.permute.xlu0 %493
        %495 = vrot.lane.b32.xlu0 %v489, 64
        %v496 = vpop.permute.xlu0 %495
        %497 = vrot.lane.b32.xlu0 %v491, 64
        %v498 = vpop.permute.xlu0 %497
        %499 = vrot.lane.b32.xlu0 %v492, 64
        %v500 = vpop.permute.xlu0 %499
        %v501 = vmul.f32 %v488, %v423
        %v502 = vmul.f32 %v489, %v424
        %v503 = vmul.f32 %v494, %v425
        %v504 = vmul.f32 %v496, %v426
        %v505 = vadd.f32 %v501, %v503
        %v506 = vadd.f32 %v502, %v504
        %s507 = scalar_lea.vmem %s387, 32 [#allocation7]
        %508 = vst [vmem:[%s507] sm:$0xff] %v505
        %509 = vst [vmem:[%s507 + $0x8] sm:$0xff] %v506
        %v510 = vmul.f32 %v491, %v423
        %v511 = vmul.f32 %v492, %v424
        %v512 = vmul.f32 %v498, %v425
        %v513 = vmul.f32 %v500, %v426
        %v514 = vadd.f32 %v510, %v512
        %v515 = vadd.f32 %v511, %v513
        %s516 = scalar_lea.vmem %s394, 32 [#allocation8]
        %517 = vst [vmem:[%s516] sm:$0xff] %v514
        %518 = vst [vmem:[%s516 + $0x8] sm:$0xff] %v515
        %s519 = scalar_lea.vmem %s329, 48 [#allocation2]
        %v520 = vld [vmem:[%s519] sm:$0xff]
        %v521 = vld [vmem:[%s519 + $0x8] sm:$0xff]
        %s522 = scalar_lea.vmem %s339, 48 [#allocation5]
        %v523 = vld [vmem:[%s522] sm:$0xff]
        %v524 = vld [vmem:[%s522 + $0x8] sm:$0xff]
        %525 = vrot.lane.b32.xlu0 %v520, 64
        %v526 = vpop.permute.xlu0 %525
        %527 = vrot.lane.b32.xlu0 %v521, 64
        %v528 = vpop.permute.xlu0 %527
        %529 = vrot.lane.b32.xlu0 %v523, 64
        %v530 = vpop.permute.xlu0 %529
        %531 = vrot.lane.b32.xlu0 %v524, 64
        %v532 = vpop.permute.xlu0 %531
        %v533 = vmul.f32 %v520, %v423
        %v534 = vmul.f32 %v521, %v424
        %v535 = vmul.f32 %v526, %v425
        %v536 = vmul.f32 %v528, %v426
        %v537 = vadd.f32 %v533, %v535
        %v538 = vadd.f32 %v534, %v536
        %s539 = scalar_lea.vmem %s387, 48 [#allocation7]
        %540 = vst [vmem:[%s539] sm:$0xff] %v537
        %541 = vst [vmem:[%s539 + $0x8] sm:$0xff] %v538
        %v542 = vmul.f32 %v523, %v423
        %v543 = vmul.f32 %v524, %v424
        %v544 = vmul.f32 %v530, %v425
        %v545 = vmul.f32 %v532, %v426
        %v546 = vadd.f32 %v542, %v544
        %v547 = vadd.f32 %v543, %v545
        %s548 = scalar_lea.vmem %s394, 48 [#allocation8]
        %549 = vst [vmem:[%s548] sm:$0xff] %v546
        %550 = vst [vmem:[%s548 + $0x8] sm:$0xff] %v547
        %s551 = sand.u32 %s176, 1
        %s552 = scalar_lea.sflag [#allocation4], %s551
        %s553 = sand.u32 %s176, 1
        %s554 = smul.addr %s553, 64
        %s555 = scalar_lea.vmem [#allocation7], %s554
        %s556 = sand.u32 %s206, 1
        %s557 = scalar_lea.sflag [#allocation9], %s556
        %s558 = sand.u32 %s206, 1
        %s559 = smul.addr %s558, 64
        %s560 = scalar_lea.vmem [#allocation8], %s559
        // Predicated region
        $region45: #{tpu_custom_call.1} parent=35 // pred_check
          %p561 = pneg %p186
        $region46: #{tpu_custom_call.1} parent=35 // pred_check_branch
          %563 = sbr.rel (%p561) target = $region48
        $region47: #{tpu_custom_call.1} parent=35 // pred_region
          %s564 = smul.u32 4, %s36
          %s565 = smul.u32 2, %s35
          %567 = vsyncadd %s552, 0
          %s568 = smul.addr %s564, 2
          %s569 = sadd.s32 %s565, %s568
          %s570 = smul.addr %s34, 8
          %s571 = sadd.s32 %s569, %s570
          %s572 = smul.addr %s571, 8
          %s573 = scalar_lea.hbm %s4, %s572
          %s574 = sshll.u32 %s555, 4
          %s575 = int_to_ptr.vmem [resolvable:$true] %s574
          %s576 = sshll.u32 %s573, 4
          %s577 = int_to_ptr.hbm [resolvable:$true] %s576
          %582 = dma.vmem_to_hbm [thread:$0]  %s575, 1024, %s577, %s552, 128, 128, 8
        $region48: #{tpu_custom_call.1} parent=35 // pred_fallthru
          _
        // Predicated region
        $region49: #{tpu_custom_call.1} parent=35 // pred_check
          %p583 = pneg %p216
        $region50: #{tpu_custom_call.1} parent=35 // pred_check_branch
          %585 = sbr.rel (%p583) target = $region52
        $region51: #{tpu_custom_call.1} parent=35 // pred_region
          %s586 = smul.u32 4, %s36
          %s587 = smul.u32 2, %s35
          %589 = vsyncadd %s557, 0
          %s590 = smul.addr %s586, 2
          %s591 = sadd.s32 %s587, %s590
          %s592 = smul.addr %s34, 8
          %s593 = sadd.s32 %s591, %s592
          %s594 = smul.addr %s593, 8
          %s595 = scalar_lea.hbm %s5, %s594
          %s596 = sshll.u32 %s560, 4
          %s597 = int_to_ptr.vmem [resolvable:$true] %s596
          %s598 = sshll.u32 %s595, 4
          %s599 = int_to_ptr.hbm [resolvable:$true] %s598
          %604 = dma.vmem_to_hbm [thread:$0]  %s597, 1024, %s599, %s557, 128, 128, 8
        $region52: #{tpu_custom_call.1} parent=35 // pred_fallthru
          _
      $region36: #{tpu_custom_call.1} parent=5 // pred_fallthru
        _
      %p605 = scmp.le.s32.totalorder 2, %s24
      // Predicated region
      $region53: #{tpu_custom_call.1} parent=5 // pred_check
        %p606 = pneg %p605
      $region54: #{tpu_custom_call.1} parent=5 // pred_check_branch
        %608 = sbr.rel (%p606) target = $region56
      $region55: #{tpu_custom_call.1} parent=5 // pred_region
        %s609 = ssub.s32 %s24, 2
        // Predicated region
        $region57: #{tpu_custom_call.1} parent=55 // pred_check
          %p610 = pneg %p192
        $region58: #{tpu_custom_call.1} parent=55 // pred_check_branch
          %612 = sbr.rel (%p610) target = $region60
        $region59: #{tpu_custom_call.1} parent=55 // pred_region
          %s613 = sand.u32 %s177, 1
          %s614 = scalar_lea.sflag [#allocation4], %s613
          %s615 = sand.u32 %s177, 1
          %s616 = smul.addr %s615, 64
          %s617 = scalar_lea.vmem [#allocation7], %s616
          %619 = dma.done %s614, 1024
        $region60: #{tpu_custom_call.1} parent=55 // pred_fallthru
          _
        // Predicated region
        $region61: #{tpu_custom_call.1} parent=55 // pred_check
          %p620 = pneg %p222
        $region62: #{tpu_custom_call.1} parent=55 // pred_check_branch
          %622 = sbr.rel (%p620) target = $region64
        $region63: #{tpu_custom_call.1} parent=55 // pred_region
          %s623 = sand.u32 %s207, 1
          %s624 = scalar_lea.sflag [#allocation9], %s623
          %s625 = sand.u32 %s207, 1
          %s626 = smul.addr %s625, 64
          %s627 = scalar_lea.vmem [#allocation8], %s626
          %629 = dma.done %s624, 1024
        $region64: #{tpu_custom_call.1} parent=55 // pred_fallthru
          _
      $region56: #{tpu_custom_call.1} parent=5 // pred_fallthru
        _
    $region6: #{tpu_custom_call.1} parent=1 // loop_footer
      %s28 = sadd.s32 1, %s24
    $region7: #{tpu_custom_call.1} parent=1 // loop_footer_branch
      %23 = sbr.rel target = $region3
    $region8: #{tpu_custom_call.1} parent=1 // loop_exit
      _
    %630 = vsyncpa [#allocation3], 1
    %s631 = scalar_lea.sflag [#allocation3], 1
    %632 = vsyncpa %s631, 1
    %633 = vsyncpa [#allocation6], 1
    %s634 = scalar_lea.sflag [#allocation6], 1
    %635 = vsyncpa %s634, 1
    %636 = vsyncpa [#allocation4], 1
    %s637 = scalar_lea.sflag [#allocation4], 1
    %638 = vsyncpa %s637, 1
    %639 = vsyncpa [#allocation9], 1
    %s640 = scalar_lea.sflag [#allocation9], 1
    %641 = vsyncpa %s640, 1

</llo_original>
